<compile_context>
chip_gen: v6e
topology: v6e:2x2x1
jax: 0.10.0
libtpu: 0.0.40
codegen_flags: <defaults>
</compile_context>

<pallas_src>
import functools

import jax
import jax.numpy as jnp
from jax.experimental import pallas as pl
from jax.experimental.pallas import tpu as pltpu

LANE = 128      # lane width (last dim)
SUBLANE = 8     # f32 sublane granularity (second-to-last dim)


def _round_up(x: int, m: int) -> int:
    return (x + m - 1) // m * m


def _mlp_kernel(*refs, num_layers: int):
    """Fused MLP: refs = (x_ref, w0, b0, w1, b1, ..., o_ref)."""
    x_ref = refs[0]
    o_ref = refs[-1]
    wb = refs[1:-1]

    x = x_ref[...]
    for i in range(num_layers):
        w = wb[2 * i][...]
        b = wb[2 * i + 1][...]          # [1, out_pad] -> broadcasts over rows
        x = jnp.dot(x, w, preferred_element_type=jnp.float32) + b
        if i < num_layers - 1:          # ReLU on every layer except the last
            x = jnp.maximum(x, 0.0)
    o_ref[...] = x.astype(o_ref.dtype)


def init_qnetwork_params(key, num_states, num_actions, hidden_layers):
    """torch.nn.Linear-style init (U(-1/sqrt(fan_in), 1/sqrt(fan_in))).

    Weights are stored [in, out] (transposed vs. PyTorch).  Layer 0 keeps its
    input dim exactly num_states (its BlockSpec covers the full array, so no
    (8,128) padding is needed and no zero-K MXU passes are done).  All other
    feature dims are zero-padded to multiples of 128 so every matmul / store
    is lane-dense.  Padding is zeros => exact for the real rows/columns.
    """
    dims = [num_states] + list(hidden_layers) + [num_actions]
    layers = []
    for i in range(len(dims) - 1):
        fan_in, fan_out = dims[i], dims[i + 1]
        key, kw, kb = jax.random.split(key, 3)
        bound = 1.0 / (fan_in ** 0.5)
        w = jax.random.uniform(kw, (fan_in, fan_out), jnp.float32, -bound, bound)
        b = jax.random.uniform(kb, (fan_out,), jnp.float32, -bound, bound)
        in_pad = fan_in if i == 0 else _round_up(fan_in, LANE)
        out_pad = _round_up(fan_out, LANE)
        w_p = jnp.zeros((in_pad, out_pad), jnp.float32).at[:fan_in, :fan_out].set(w)
        b_p = jnp.zeros((1, out_pad), jnp.float32).at[0, :fan_out].set(b)
        layers.append((w_p, b_p))
    return {"layers": layers, "dims": dims}


def _choose_batch_tiling(batch: int, max_tile: int = 512):
    """Return (m_tile, batch_pad).

    - batch padded only to a multiple of SUBLANE (no full-tile rounding waste)
    - tiles balanced and capped at max_tile rows
    - >= 2 grid steps whenever batch > SUBLANE so v7x's 2 TensorCores both work
      (on v5e/v6e the extra step costs ~0.35 us, negligible).
    """
    bp = _round_up(batch, SUBLANE)
    if bp <= SUBLANE:
        return bp, bp
    n_tiles = max(2, pl.cdiv(bp, max_tile))
    m_tile = _round_up(pl.cdiv(bp, n_tiles), SUBLANE)
    return m_tile, m_tile * n_tiles


def qnetwork_forward(params, state):
    """Forward pass matching QNetwork.forward (ReLU after all but last layer)."""
    layers = params["layers"]
    dims = params["dims"]
    num_layers = len(layers)
    num_states = dims[0]
    num_actions = dims[-1]
    out_pad = layers[-1][0].shape[1]

    if state.dtype != jnp.float32:
        # Kernel tiling assumes f32 activations (PyTorch module is f32 anyway).
        state = state.astype(jnp.float32)
    batch = state.shape[0]
    assert state.shape[1] == num_states, "state feature dim mismatch"

    m_tile, batch_pad = _choose_batch_tiling(batch)
    # Only row-padding (if batch is not a multiple of 8); feature dim untouched,
    # so no lane-padded HBM copy of the activations is ever materialized.
    x = state if batch_pad == batch else jnp.pad(state, ((0, batch_pad - batch), (0, 0)))

    flat_params = []
    in_specs = [pl.BlockSpec((m_tile, num_states), lambda i: (i, 0))]
    flops = 0
    bytes_accessed = 4 * batch_pad * (num_states + out_pad)
    for w, b in layers:
        flat_params.extend([w, b])
        # Weights/biases: full-array blocks, constant index_map -> resident in
        # VMEM, not re-fetched across grid steps.
        in_specs.append(pl.BlockSpec(w.shape, lambda i: (0, 0)))
        in_specs.append(pl.BlockSpec(b.shape, lambda i: (0, 0)))
        flops += 2 * batch_pad * w.shape[0] * w.shape[1]
        bytes_accessed += 4 * (w.size + b.size)

    out_padded = pl.pallas_call(
        functools.partial(_mlp_kernel, num_layers=num_layers),
        out_shape=jax.ShapeDtypeStruct((batch_pad, out_pad), jnp.float32),
        grid=(batch_pad // m_tile,),
        in_specs=in_specs,
        out_specs=pl.BlockSpec((m_tile, out_pad), lambda i: (i, 0)),
        compiler_params=pltpu.CompilerParams(
            dimension_semantics=("parallel",)),  # shards batch tiles across TCs on v7x
        cost_estimate=pl.CostEstimate(
            flops=int(flops), transcendentals=0, bytes_accessed=int(bytes_accessed)),
    )(x, *flat_params)

    # NOTE: padded action columns are 0 and padded batch rows carry bias-only
    # garbage -- always slice before argmax/loss (done here).
    return out_padded[:batch, :num_actions]


def qnetwork_forward_ref(params, state):
    """Pure-JAX reference using the UNPADDED slices of the parameters."""
    layers = params["layers"]
    dims = params["dims"]
    n = len(layers)
    x = state.astype(jnp.float32)
    for i, (w, b) in enumerate(layers):
        d_in, d_out = dims[i], dims[i + 1]
        x = x @ w[:d_in, :d_out] + b[:, :d_out]
        if i < n - 1:
            x = jnp.maximum(x, 0.0)
    return x


if __name__ == "__main__":
    num_states = 16
    num_actions = 8
    hidden_layers = [32, 32]

    key = jax.random.PRNGKey(0)
    key, k_params, k_x1, k_x2, k_x3 = jax.random.split(key, 5)
    params = init_qnetwork_params(k_params, num_states, num_actions, hidden_layers)

    # Case 1: tiny single-step batch (grid=(1,), m_tile=8).
    state = jax.random.normal(k_x1, (8, num_states), jnp.float32)
    out = jax.block_until_ready(qnetwork_forward(params, state))
    ref = qnetwork_forward_ref(params, state)
    assert out.shape == (8, num_actions)
    assert jnp.allclose(out, ref, atol=1e-4, rtol=1e-4), "mismatch vs. reference (batch=8)"

    # Case 2: replay-buffer-sized batch -> 2 balanced tiles of 128 rows.
    state_big = jax.random.normal(k_x2, (256, num_states), jnp.float32)
    out_big = jax.block_until_ready(qnetwork_forward(params, state_big))
    ref_big = qnetwork_forward_ref(params, state_big)
    assert out_big.shape == (256, num_actions)
    assert jnp.allclose(out_big, ref_big, atol=1e-4, rtol=1e-4), "mismatch vs. reference (batch=256)"

    # Case 3: awkward batch (not a multiple of 8) -> row padding path, 2 tiles of 56.
    state_odd = jax.random.normal(k_x3, (100, num_states), jnp.float32)
    out_odd = jax.block_until_ready(qnetwork_forward(params, state_odd))
    ref_odd = qnetwork_forward_ref(params, state_odd)
    assert out_odd.shape == (100, num_actions)
    assert jnp.allclose(out_odd, ref_odd, atol=1e-4, rtol=1e-4), "mismatch vs. reference (batch=100)"

    print("KERNEL_OK")
</pallas_src>

<mosaic_0001>
module attributes {stable_mosaic.version = 11 : i64} {
  func.func @_mlp_kernel(%arg0: i32, %arg1: memref<8x16xf32, #tpu.memory_space<vmem>>, %arg2: memref<16x128xf32, #tpu.memory_space<vmem>>, %arg3: memref<1x128xf32, #tpu.memory_space<vmem>>, %arg4: memref<128x128xf32, #tpu.memory_space<vmem>>, %arg5: memref<1x128xf32, #tpu.memory_space<vmem>>, %arg6: memref<128x128xf32, #tpu.memory_space<vmem>>, %arg7: memref<1x128xf32, #tpu.memory_space<vmem>>, %arg8: memref<8x128xf32, #tpu.memory_space<vmem>>) attributes {dimension_semantics = [#tpu.dimension_semantics<parallel>], iteration_bounds = array<i64: 1>, scalar_prefetch = 0 : i64, scratch_operands = 0 : i64, tpu.core_type = #tpu.core_type<tc>, window_params = [{transform_indices = @transform_0, window_bounds = array<i64: 8, 16>}, {pipeline_mode = #tpu.pipeline_mode<synchronous>, transform_indices = @transform_1, window_bounds = array<i64: 16, 128>}, {pipeline_mode = #tpu.pipeline_mode<synchronous>, transform_indices = @transform_2, window_bounds = array<i64: 1, 128>}, {pipeline_mode = #tpu.pipeline_mode<synchronous>, transform_indices = @transform_3, window_bounds = array<i64: 128, 128>}, {pipeline_mode = #tpu.pipeline_mode<synchronous>, transform_indices = @transform_4, window_bounds = array<i64: 1, 128>}, {pipeline_mode = #tpu.pipeline_mode<synchronous>, transform_indices = @transform_5, window_bounds = array<i64: 128, 128>}, {pipeline_mode = #tpu.pipeline_mode<synchronous>, transform_indices = @transform_6, window_bounds = array<i64: 1, 128>}, {transform_indices = @transform_7, window_bounds = array<i64: 8, 128>}]} {
    %c0 = arith.constant 0 : index
    %c0_0 = arith.constant 0 : index
    %0 = vector.load %arg1[%c0, %c0_0] : memref<8x16xf32, #tpu.memory_space<vmem>>, vector<8x16xf32>
    %c0_1 = arith.constant 0 : index
    %c0_2 = arith.constant 0 : index
    %1 = vector.load %arg2[%c0_1, %c0_2] : memref<16x128xf32, #tpu.memory_space<vmem>>, vector<16x128xf32>
    %c0_3 = arith.constant 0 : index
    %c0_4 = arith.constant 0 : index
    %2 = vector.load %arg3[%c0_3, %c0_4] : memref<1x128xf32, #tpu.memory_space<vmem>>, vector<1x128xf32>
    %cst = arith.constant dense<0.000000e+00> : vector<8x128xf32>
    %3 = tpu.matmul %0, %1, %cst {dimension_numbers = #tpu.dot_dimension_numbers<[1], [0], [0], [1], [0, 0, 1, 1], [], []>} : vector<8x16xf32>, vector<16x128xf32>, vector<8x128xf32> -> vector<8x128xf32>
    %4 = vector.broadcast %2 : vector<1x128xf32> to vector<8x128xf32>
    %5 = arith.addf %3, %4 : vector<8x128xf32>
    %cst_5 = arith.constant 0.000000e+00 : f32
    %6 = vector.broadcast %cst_5 : f32 to vector<8x128xf32>
    %7 = arith.maximumf %5, %6 : vector<8x128xf32>
    %c0_6 = arith.constant 0 : index
    %c0_7 = arith.constant 0 : index
    %8 = vector.load %arg4[%c0_6, %c0_7] : memref<128x128xf32, #tpu.memory_space<vmem>>, vector<128x128xf32>
    %c0_8 = arith.constant 0 : index
    %c0_9 = arith.constant 0 : index
    %9 = vector.load %arg5[%c0_8, %c0_9] : memref<1x128xf32, #tpu.memory_space<vmem>>, vector<1x128xf32>
    %cst_10 = arith.constant dense<0.000000e+00> : vector<8x128xf32>
    %10 = tpu.matmul %7, %8, %cst_10 {dimension_numbers = #tpu.dot_dimension_numbers<[1], [0], [0], [1], [0, 0, 1, 1], [], []>} : vector<8x128xf32>, vector<128x128xf32>, vector<8x128xf32> -> vector<8x128xf32>
    %11 = vector.broadcast %9 : vector<1x128xf32> to vector<8x128xf32>
    %12 = arith.addf %10, %11 : vector<8x128xf32>
    %cst_11 = arith.constant 0.000000e+00 : f32
    %13 = vector.broadcast %cst_11 : f32 to vector<8x128xf32>
    %14 = arith.maximumf %12, %13 : vector<8x128xf32>
    %c0_12 = arith.constant 0 : index
    %c0_13 = arith.constant 0 : index
    %15 = vector.load %arg6[%c0_12, %c0_13] : memref<128x128xf32, #tpu.memory_space<vmem>>, vector<128x128xf32>
    %c0_14 = arith.constant 0 : index
    %c0_15 = arith.constant 0 : index
    %16 = vector.load %arg7[%c0_14, %c0_15] : memref<1x128xf32, #tpu.memory_space<vmem>>, vector<1x128xf32>
    %cst_16 = arith.constant dense<0.000000e+00> : vector<8x128xf32>
    %17 = tpu.matmul %14, %15, %cst_16 {dimension_numbers = #tpu.dot_dimension_numbers<[1], [0], [0], [1], [0, 0, 1, 1], [], []>} : vector<8x128xf32>, vector<128x128xf32>, vector<8x128xf32> -> vector<8x128xf32>
    %18 = vector.broadcast %16 : vector<1x128xf32> to vector<8x128xf32>
    %19 = arith.addf %17, %18 : vector<8x128xf32>
    %c0_17 = arith.constant 0 : index
    %c0_18 = arith.constant 0 : index
    %20 = vector.load %arg8[%c0_17, %c0_18] : memref<8x128xf32, #tpu.memory_space<vmem>>, vector<8x128xf32>
    tpu.vector_store %arg8[%c0_17, %c0_18], %19 {strides = array<i32>} : memref<8x128xf32, #tpu.memory_space<vmem>>, vector<8x128xf32>,
    return
  }
  func.func @transform_0(%arg0: i32) -> (i32, i32) {
    %c0_i32 = arith.constant 0 : i32
    %c0_i32_0 = arith.constant 0 : i32
    return %arg0, %c0_i32 : i32, i32
  }
  func.func @transform_1(%arg0: i32) -> (i32, i32) {
    %c0_i32 = arith.constant 0 : i32
    %c0_i32_0 = arith.constant 0 : i32
    %c0_i32_1 = arith.constant 0 : i32
    return %c0_i32, %c0_i32_0 : i32, i32
  }
  func.func @transform_2(%arg0: i32) -> (i32, i32) {
    %c0_i32 = arith.constant 0 : i32
    %c0_i32_0 = arith.constant 0 : i32
    %c0_i32_1 = arith.constant 0 : i32
    return %c0_i32, %c0_i32_0 : i32, i32
  }
  func.func @transform_3(%arg0: i32) -> (i32, i32) {
    %c0_i32 = arith.constant 0 : i32
    %c0_i32_0 = arith.constant 0 : i32
    %c0_i32_1 = arith.constant 0 : i32
    return %c0_i32, %c0_i32_0 : i32, i32
  }
  func.func @transform_4(%arg0: i32) -> (i32, i32) {
    %c0_i32 = arith.constant 0 : i32
    %c0_i32_0 = arith.constant 0 : i32
    %c0_i32_1 = arith.constant 0 : i32
    return %c0_i32, %c0_i32_0 : i32, i32
  }
  func.func @transform_5(%arg0: i32) -> (i32, i32) {
    %c0_i32 = arith.constant 0 : i32
    %c0_i32_0 = arith.constant 0 : i32
    %c0_i32_1 = arith.constant 0 : i32
    return %c0_i32, %c0_i32_0 : i32, i32
  }
  func.func @transform_6(%arg0: i32) -> (i32, i32) {
    %c0_i32 = arith.constant 0 : i32
    %c0_i32_0 = arith.constant 0 : i32
    %c0_i32_1 = arith.constant 0 : i32
    return %c0_i32, %c0_i32_0 : i32, i32
  }
  func.func @transform_7(%arg0: i32) -> (i32, i32) {
    %c0_i32 = arith.constant 0 : i32
    %c0_i32_0 = arith.constant 0 : i32
    return %arg0, %c0_i32 : i32, i32
  }
}

</mosaic_0001>

<llo_original>
// kernel: tpu_custom_call.1
$region0: #{tpu_custom_call.1}
  #allocation0 [shape = 'u32[]', space=smem, size = 0x4, offset = 0x4, fixed_abs, tag = 'smem constant byte address 0x4 - core index']
  #allocation1 [shape = 'u32[144,128]{1,0:T(1,128)}', space=vmem, size = 0x12000, scoped, tag = 'internal scratch']
  %s0 = inlined_call_operand.hbm [shape: f32[8,16], index: 0, kind: input, shape index: {}]
  %s1 = inlined_call_operand.hbm [shape: f32[16,128], index: 1, kind: input, shape index: {}]
  %s2 = inlined_call_operand.vmem [shape: f32[1,128], index: 2, kind: input, shape index: {}]
  %s3 = inlined_call_operand.hbm [shape: f32[128,128], index: 3, kind: input, shape index: {}]
  %s4 = inlined_call_operand.vmem [shape: f32[1,128], index: 4, kind: input, shape index: {}]
  %s5 = inlined_call_operand.hbm [shape: f32[128,128], index: 5, kind: input, shape index: {}]
  %s6 = inlined_call_operand.vmem [shape: f32[1,128], index: 6, kind: input, shape index: {}]
  %s7 = inlined_call_operand.hbm [shape: f32[8,128], index: 7, kind: output, shape index: {}]
  %s8 = sld [smem:[#allocation0]]
  $region54: #{tpu_custom_call.1} parent=0
    _
  %s10 = ssub.s32 1, %s8
  %s11 = scalar_select 0, %s10, %s8
  $region1: #{tpu_custom_call.1} parent=0
    #allocation2 [shape = 'u8[4096]{0}', space=vmem, size = 0x1000, scoped, tag = 'input window, operand 0, single buffered']
    #allocation3 [shape = 's32[1]{0}', space=sflag, size = 0x4, scoped, tag = 'scoped memory for tpu_custom_call.1']
    #allocation4 [shape = 's32[1]{0}', space=sflag, size = 0x4, scoped, tag = 'scoped memory for tpu_custom_call.1']
    #allocation5 [shape = 'u8[8192]{0}', space=vmem, size = 0x2000, scoped, tag = 'input window, operand 1, single buffered']
    #allocation6 [shape = 's32[1]{0}', space=sflag, size = 0x4, scoped, tag = 'scoped memory for tpu_custom_call.1']
    #allocation7 [shape = 'u8[65536]{0}', space=vmem, size = 0x10000, scoped, tag = 'input window, operand 3, single buffered']
    #allocation8 [shape = 'u8[65536]{0}', space=vmem, size = 0x10000, scoped, tag = 'input window, operand 5, single buffered']
    #allocation9 [shape = 's32[1]{0}', space=sflag, size = 0x4, scoped, tag = 'scoped memory for tpu_custom_call.1']
    #allocation10 [shape = 'u8[4096]{0}', space=vmem, size = 0x1000, scoped, tag = 'output window, operand 0, single buffered']
    %12 = vsyncpa [#allocation3], 0
    %13 = vsyncpa [#allocation6], 0
    %14 = vsyncpa [#allocation9], 0
    %15 = vsyncpa [#allocation4], 0
    // Predicated region
    $region2: #{tpu_custom_call.1} parent=1 // pred_check
      _
    $region3: #{tpu_custom_call.1} parent=1 // pred_check_branch
      %17 = sbr.rel (0) target = $region5
    $region4: #{tpu_custom_call.1} parent=1 // pred_region
      %s19 = ssub.s32 128, 128
      %20 = vsyncadd [#allocation3], %s19
      %s22 = sshll.u32 [#allocation2], 4
      %s23 = int_to_ptr.vmem [resolvable:$true] %s22
      %25 = dma.hbm_to_vmem [thread:$0]  %s0, 128, %s23, [#allocation3]
    $region5: #{tpu_custom_call.1} parent=1 // pred_fallthru
      _
    // Predicated region
    $region6: #{tpu_custom_call.1} parent=1 // pred_check
      _
    $region7: #{tpu_custom_call.1} parent=1 // pred_check_branch
      %27 = sbr.rel (0) target = $region9
    $region8: #{tpu_custom_call.1} parent=1 // pred_region
      %s29 = ssub.s32 256, 256
      %30 = vsyncadd [#allocation6], %s29
      %s31 = sshll.u32 [#allocation5], 4
      %s32 = int_to_ptr.vmem [resolvable:$true] %s31
      %37 = dma.hbm_to_vmem [thread:$0]  %s1, 256, %s32, [#allocation6], 128, 128, 8
    $region9: #{tpu_custom_call.1} parent=1 // pred_fallthru
      _
    // Predicated region
    $region10: #{tpu_custom_call.1} parent=1 // pred_check
      _
    $region11: #{tpu_custom_call.1} parent=1 // pred_check_branch
      %39 = sbr.rel (0) target = $region13
    $region12: #{tpu_custom_call.1} parent=1 // pred_region
      _
    $region13: #{tpu_custom_call.1} parent=1 // pred_fallthru
      _
    // Predicated region
    $region14: #{tpu_custom_call.1} parent=1 // pred_check
      _
    $region15: #{tpu_custom_call.1} parent=1 // pred_check_branch
      %41 = sbr.rel (0) target = $region17
    $region16: #{tpu_custom_call.1} parent=1 // pred_region
      %s43 = ssub.s32 2048, 2048
      %44 = vsyncadd [#allocation6], %s43
      %s45 = sshll.u32 [#allocation7], 4
      %s46 = int_to_ptr.vmem [resolvable:$true] %s45
      %51 = dma.hbm_to_vmem [thread:$0]  %s3, 2048, %s46, [#allocation6], 128, 128, 8
    $region17: #{tpu_custom_call.1} parent=1 // pred_fallthru
      _
    // Predicated region
    $region18: #{tpu_custom_call.1} parent=1 // pred_check
      _
    $region19: #{tpu_custom_call.1} parent=1 // pred_check_branch
      %53 = sbr.rel (0) target = $region21
    $region20: #{tpu_custom_call.1} parent=1 // pred_region
      _
    $region21: #{tpu_custom_call.1} parent=1 // pred_fallthru
      _
    // Predicated region
    $region22: #{tpu_custom_call.1} parent=1 // pred_check
      _
    $region23: #{tpu_custom_call.1} parent=1 // pred_check_branch
      %55 = sbr.rel (0) target = $region25
    $region24: #{tpu_custom_call.1} parent=1 // pred_region
      %s57 = ssub.s32 2048, 2048
      %58 = vsyncadd [#allocation9], %s57
      %s59 = sshll.u32 [#allocation8], 4
      %s60 = int_to_ptr.vmem [resolvable:$true] %s59
      %65 = dma.hbm_to_vmem [thread:$0]  %s5, 2048, %s60, [#allocation9], 128, 128, 8
    $region25: #{tpu_custom_call.1} parent=1 // pred_fallthru
      _
    // Predicated region
    $region26: #{tpu_custom_call.1} parent=1 // pred_check
      _
    $region27: #{tpu_custom_call.1} parent=1 // pred_check_branch
      %67 = sbr.rel (0) target = $region29
    $region28: #{tpu_custom_call.1} parent=1 // pred_region
      _
    $region29: #{tpu_custom_call.1} parent=1 // pred_fallthru
      _
    // Predicated region
    $region30: #{tpu_custom_call.1} parent=1 // pred_check
      _
    $region31: #{tpu_custom_call.1} parent=1 // pred_check_branch
      %69 = sbr.rel (0) target = $region33
    $region32: #{tpu_custom_call.1} parent=1 // pred_region
      %70 = dma.done [#allocation3], 128
    $region33: #{tpu_custom_call.1} parent=1 // pred_fallthru
      _
    // Predicated region
    $region34: #{tpu_custom_call.1} parent=1 // pred_check
      _
    $region35: #{tpu_custom_call.1} parent=1 // pred_check_branch
      %72 = sbr.rel (0) target = $region37
    $region36: #{tpu_custom_call.1} parent=1 // pred_region
      %73 = dma.done [#allocation6], 256
    $region37: #{tpu_custom_call.1} parent=1 // pred_fallthru
      _
    // Predicated region
    $region38: #{tpu_custom_call.1} parent=1 // pred_check
      _
    $region39: #{tpu_custom_call.1} parent=1 // pred_check_branch
      %75 = sbr.rel (0) target = $region41
    $region40: #{tpu_custom_call.1} parent=1 // pred_region
      %76 = dma.done [#allocation6], 2048
    $region41: #{tpu_custom_call.1} parent=1 // pred_fallthru
      _
    // Predicated region
    $region42: #{tpu_custom_call.1} parent=1 // pred_check
      _
    $region43: #{tpu_custom_call.1} parent=1 // pred_check_branch
      %78 = sbr.rel (0) target = $region45
    $region44: #{tpu_custom_call.1} parent=1 // pred_region
      %79 = dma.done [#allocation9], 2048
    $region45: #{tpu_custom_call.1} parent=1 // pred_fallthru
      _
    %v80 = vld [vmem:[#allocation2] sm:$0xff]
    %v81 = vld [vmem:[#allocation5] sm:$0xff]
    %v82 = vld [vmem:[#allocation5 + $0x8] sm:$0xff]
    %v83 = vld [vmem:[%s2] sm:$0x1]
    %v85 = vlaneseq
    %v86 = vshrl.u32 %v85, 7
    %v87 = vsub.s32 0, %v86
    %v88 = vrot.slane %v83, %v87
    %vm90 = vcmask 130048
    %v92 = vsel %vm90, %v80, 0
    %94 = vmatprep.subr.mxu0 0.0
    %95 = vmatpush1.msra.mxu0 0.0
    %96 = vmatprep.subr.mxu0 0.0
    %97 = vmatpush1.msra.mxu0 0.0
    %98 = vmatprep.subr.mxu0 0.0
    %99 = vmatpush1.msra.mxu0 0.0
    %100 = vmatprep.subr.mxu0 0.0
    %101 = vmatpush1.msra.mxu0 0.0
    %102 = vmatprep.subr.mxu0 0.0
    %103 = vmatpush1.msra.mxu0 0.0
    %104 = vmatprep.subr.mxu0 0.0
    %105 = vmatpush1.msra.mxu0 0.0
    %106 = vmatprep.subr.mxu0 0.0
    %107 = vmatpush1.msra.mxu0 0.0
    %108 = vmatprep.subr.mxu0 0.0
    %109 = vmatpush1.msra.mxu0 0.0
    %110 = vmatprep.subr.mxu0 0.0
    %111 = vmatpush1.msra.mxu0 0.0
    %112 = vmatprep.subr.mxu0 0.0
    %113 = vmatpush1.msra.mxu0 0.0
    %114 = vmatprep.subr.mxu0 0.0
    %115 = vmatpush1.msra.mxu0 0.0
    %116 = vmatprep.subr.mxu0 0.0
    %117 = vmatpush1.msra.mxu0 0.0
    %118 = vmatprep.subr.mxu0 0.0
    %119 = vmatpush1.msra.mxu0 0.0
    %120 = vmatprep.subr.mxu0 0.0
    %121 = vmatpush1.msra.mxu0 0.0
    %122 = vmatprep.subr.mxu0 0.0
    %123 = vmatpush1.msra.mxu0 %v82
    %124 = vmatprep.subr.mxu0 0.0
    %125 = vmatpush1.msra.mxu0 %v81
    %126 = vmatprep.subr.mxu0 0.0
    %127 = vmatpush2.msra.mxu0 0.0
    %128 = vmatprep.subr.mxu0 0.0
    %129 = vmatpush2.msra.mxu0 0.0
    %130 = vmatprep.subr.mxu0 0.0
    %131 = vmatpush2.msra.mxu0 0.0
    %132 = vmatprep.subr.mxu0 0.0
    %133 = vmatpush2.msra.mxu0 0.0
    %134 = vmatprep.subr.mxu0 0.0
    %135 = vmatpush2.msra.mxu0 0.0
    %136 = vmatprep.subr.mxu0 0.0
    %137 = vmatpush2.msra.mxu0 0.0
    %138 = vmatprep.subr.mxu0 0.0
    %139 = vmatpush2.msra.mxu0 0.0
    %140 = vmatprep.subr.mxu0 0.0
    %141 = vmatpush2.msra.mxu0 0.0
    %142 = vmatprep.subr.mxu0 0.0
    %143 = vmatpush2.msra.mxu0 0.0
    %144 = vmatprep.subr.mxu0 0.0
    %145 = vmatpush2.msra.mxu0 0.0
    %146 = vmatprep.subr.mxu0 0.0
    %147 = vmatpush2.msra.mxu0 0.0
    %148 = vmatprep.subr.mxu0 0.0
    %149 = vmatpush2.msra.mxu0 0.0
    %150 = vmatprep.subr.mxu0 0.0
    %151 = vmatpush2.msra.mxu0 0.0
    %152 = vmatprep.subr.mxu0 0.0
    %153 = vmatpush2.msra.mxu0 0.0
    %154 = vmatprep.subr.mxu0 0.0
    %155 = vmatpush2.msra.mxu0 0.0
    %156 = vmatprep.subr.mxu0 0.0
    %157 = vmatpush2.msra.mxu0 0.0
    %158 = vmatprep.mubr.f32.mxu0 0.0
    %159 = vmatmul.mubr.f32.gmra.mxu0 %v92
    %v160 = vpop.f32.mrf.mxu0
    %v161 = vadd.f32 %v88, %v160
    %v162 = vpop.f32.mrf.mxu0
    %163 = vdwg.mxu0
    %v164 = vmax.f32 %v161, 0.0
    %v165 = vld [vmem:[#allocation7] sm:$0xff]
    %v166 = vld [vmem:[#allocation7 + $0x8] sm:$0xff]
    %v167 = vld [vmem:[#allocation7 + $0x10] sm:$0xff]
    %v168 = vld [vmem:[#allocation7 + $0x18] sm:$0xff]
    %v169 = vld [vmem:[#allocation7 + $0x20] sm:$0xff]
    %v170 = vld [vmem:[#allocation7 + $0x28] sm:$0xff]
    %v171 = vld [vmem:[#allocation7 + $0x30] sm:$0xff]
    %v172 = vld [vmem:[#allocation7 + $0x38] sm:$0xff]
    %v173 = vld [vmem:[#allocation7 + $0x40] sm:$0xff]
    %v174 = vld [vmem:[#allocation7 + $0x48] sm:$0xff]
    %v175 = vld [vmem:[#allocation7 + $0x50] sm:$0xff]
    %v176 = vld [vmem:[#allocation7 + $0x58] sm:$0xff]
    %v177 = vld [vmem:[#allocation7 + $0x60] sm:$0xff]
    %v178 = vld [vmem:[#allocation7 + $0x68] sm:$0xff]
    %v179 = vld [vmem:[#allocation7 + $0x70] sm:$0xff]
    %v180 = vld [vmem:[#allocation7 + $0x78] sm:$0xff]
    %v181 = vld [vmem:[%s4] sm:$0x1]
    %v183 = vlaneseq
    %v184 = vshrl.u32 %v183, 7
    %v185 = vsub.s32 0, %v184
    %v186 = vrot.slane %v181, %v185
    %188 = vmatprep.subr.mxu0 0.0
    %189 = vmatpush1.msra.mxu0 %v180
    %190 = vmatprep.subr.mxu0 0.0
    %191 = vmatpush1.msra.mxu0 %v179
    %192 = vmatprep.subr.mxu0 0.0
    %193 = vmatpush1.msra.mxu0 %v178
    %194 = vmatprep.subr.mxu0 0.0
    %195 = vmatpush1.msra.mxu0 %v177
    %196 = vmatprep.subr.mxu0 0.0
    %197 = vmatpush1.msra.mxu0 %v176
    %198 = vmatprep.subr.mxu0 0.0
    %199 = vmatpush1.msra.mxu0 %v175
    %200 = vmatprep.subr.mxu0 0.0
    %201 = vmatpush1.msra.mxu0 %v174
    %202 = vmatprep.subr.mxu0 0.0
    %203 = vmatpush1.msra.mxu0 %v173
    %204 = vmatprep.subr.mxu0 0.0
    %205 = vmatpush1.msra.mxu0 %v172
    %206 = vmatprep.subr.mxu0 0.0
    %207 = vmatpush1.msra.mxu0 %v171
    %208 = vmatprep.subr.mxu0 0.0
    %209 = vmatpush1.msra.mxu0 %v170
    %210 = vmatprep.subr.mxu0 0.0
    %211 = vmatpush1.msra.mxu0 %v169
    %212 = vmatprep.subr.mxu0 0.0
    %213 = vmatpush1.msra.mxu0 %v168
    %214 = vmatprep.subr.mxu0 0.0
    %215 = vmatpush1.msra.mxu0 %v167
    %216 = vmatprep.subr.mxu0 0.0
    %217 = vmatpush1.msra.mxu0 %v166
    %218 = vmatprep.subr.mxu0 0.0
    %219 = vmatpush1.msra.mxu0 %v165
    %220 = vmatprep.subr.mxu0 0.0
    %221 = vmatpush2.msra.mxu0 0.0
    %222 = vmatprep.subr.mxu0 0.0
    %223 = vmatpush2.msra.mxu0 0.0
    %224 = vmatprep.subr.mxu0 0.0
    %225 = vmatpush2.msra.mxu0 0.0
    %226 = vmatprep.subr.mxu0 0.0
    %227 = vmatpush2.msra.mxu0 0.0
    %228 = vmatprep.subr.mxu0 0.0
    %229 = vmatpush2.msra.mxu0 0.0
    %230 = vmatprep.subr.mxu0 0.0
    %231 = vmatpush2.msra.mxu0 0.0
    %232 = vmatprep.subr.mxu0 0.0
    %233 = vmatpush2.msra.mxu0 0.0
    %234 = vmatprep.subr.mxu0 0.0
    %235 = vmatpush2.msra.mxu0 0.0
    %236 = vmatprep.subr.mxu0 0.0
    %237 = vmatpush2.msra.mxu0 0.0
    %238 = vmatprep.subr.mxu0 0.0
    %239 = vmatpush2.msra.mxu0 0.0
    %240 = vmatprep.subr.mxu0 0.0
    %241 = vmatpush2.msra.mxu0 0.0
    %242 = vmatprep.subr.mxu0 0.0
    %243 = vmatpush2.msra.mxu0 0.0
    %244 = vmatprep.subr.mxu0 0.0
    %245 = vmatpush2.msra.mxu0 0.0
    %246 = vmatprep.subr.mxu0 0.0
    %247 = vmatpush2.msra.mxu0 0.0
    %248 = vmatprep.subr.mxu0 0.0
    %249 = vmatpush2.msra.mxu0 0.0
    %250 = vmatprep.subr.mxu0 0.0
    %251 = vmatpush2.msra.mxu0 0.0
    %252 = vmatprep.mubr.f32.mxu0 0.0
    %253 = vmatmul.mubr.f32.gmra.mxu0 %v164
    %v254 = vpop.f32.mrf.mxu0
    %v255 = vadd.f32 %v186, %v254
    %v256 = vpop.f32.mrf.mxu0
    %257 = vdwg.mxu0
    %v258 = vmax.f32 %v255, 0.0
    %v259 = vld [vmem:[#allocation8] sm:$0xff]
    %v260 = vld [vmem:[#allocation8 + $0x8] sm:$0xff]
    %v261 = vld [vmem:[#allocation8 + $0x10] sm:$0xff]
    %v262 = vld [vmem:[#allocation8 + $0x18] sm:$0xff]
    %v263 = vld [vmem:[#allocation8 + $0x20] sm:$0xff]
    %v264 = vld [vmem:[#allocation8 + $0x28] sm:$0xff]
    %v265 = vld [vmem:[#allocation8 + $0x30] sm:$0xff]
    %v266 = vld [vmem:[#allocation8 + $0x38] sm:$0xff]
    %v267 = vld [vmem:[#allocation8 + $0x40] sm:$0xff]
    %v268 = vld [vmem:[#allocation8 + $0x48] sm:$0xff]
    %v269 = vld [vmem:[#allocation8 + $0x50] sm:$0xff]
    %v270 = vld [vmem:[#allocation8 + $0x58] sm:$0xff]
    %v271 = vld [vmem:[#allocation8 + $0x60] sm:$0xff]
    %v272 = vld [vmem:[#allocation8 + $0x68] sm:$0xff]
    %v273 = vld [vmem:[#allocation8 + $0x70] sm:$0xff]
    %v274 = vld [vmem:[#allocation8 + $0x78] sm:$0xff]
    %v275 = vld [vmem:[%s6] sm:$0x1]
    %v277 = vlaneseq
    %v278 = vshrl.u32 %v277, 7
    %v279 = vsub.s32 0, %v278
    %v280 = vrot.slane %v275, %v279
    %282 = vmatprep.subr.mxu0 0.0
    %283 = vmatpush1.msra.mxu0 %v274
    %284 = vmatprep.subr.mxu0 0.0
    %285 = vmatpush1.msra.mxu0 %v273
    %286 = vmatprep.subr.mxu0 0.0
    %287 = vmatpush1.msra.mxu0 %v272
    %288 = vmatprep.subr.mxu0 0.0
    %289 = vmatpush1.msra.mxu0 %v271
    %290 = vmatprep.subr.mxu0 0.0
    %291 = vmatpush1.msra.mxu0 %v270
    %292 = vmatprep.subr.mxu0 0.0
    %293 = vmatpush1.msra.mxu0 %v269
    %294 = vmatprep.subr.mxu0 0.0
    %295 = vmatpush1.msra.mxu0 %v268
    %296 = vmatprep.subr.mxu0 0.0
    %297 = vmatpush1.msra.mxu0 %v267
    %298 = vmatprep.subr.mxu0 0.0
    %299 = vmatpush1.msra.mxu0 %v266
    %300 = vmatprep.subr.mxu0 0.0
    %301 = vmatpush1.msra.mxu0 %v265
    %302 = vmatprep.subr.mxu0 0.0
    %303 = vmatpush1.msra.mxu0 %v264
    %304 = vmatprep.subr.mxu0 0.0
    %305 = vmatpush1.msra.mxu0 %v263
    %306 = vmatprep.subr.mxu0 0.0
    %307 = vmatpush1.msra.mxu0 %v262
    %308 = vmatprep.subr.mxu0 0.0
    %309 = vmatpush1.msra.mxu0 %v261
    %310 = vmatprep.subr.mxu0 0.0
    %311 = vmatpush1.msra.mxu0 %v260
    %312 = vmatprep.subr.mxu0 0.0
    %313 = vmatpush1.msra.mxu0 %v259
    %314 = vmatprep.subr.mxu0 0.0
    %315 = vmatpush2.msra.mxu0 0.0
    %316 = vmatprep.subr.mxu0 0.0
    %317 = vmatpush2.msra.mxu0 0.0
    %318 = vmatprep.subr.mxu0 0.0
    %319 = vmatpush2.msra.mxu0 0.0
    %320 = vmatprep.subr.mxu0 0.0
    %321 = vmatpush2.msra.mxu0 0.0
    %322 = vmatprep.subr.mxu0 0.0
    %323 = vmatpush2.msra.mxu0 0.0
    %324 = vmatprep.subr.mxu0 0.0
    %325 = vmatpush2.msra.mxu0 0.0
    %326 = vmatprep.subr.mxu0 0.0
    %327 = vmatpush2.msra.mxu0 0.0
    %328 = vmatprep.subr.mxu0 0.0
    %329 = vmatpush2.msra.mxu0 0.0
    %330 = vmatprep.subr.mxu0 0.0
    %331 = vmatpush2.msra.mxu0 0.0
    %332 = vmatprep.subr.mxu0 0.0
    %333 = vmatpush2.msra.mxu0 0.0
    %334 = vmatprep.subr.mxu0 0.0
    %335 = vmatpush2.msra.mxu0 0.0
    %336 = vmatprep.subr.mxu0 0.0
    %337 = vmatpush2.msra.mxu0 0.0
    %338 = vmatprep.subr.mxu0 0.0
    %339 = vmatpush2.msra.mxu0 0.0
    %340 = vmatprep.subr.mxu0 0.0
    %341 = vmatpush2.msra.mxu0 0.0
    %342 = vmatprep.subr.mxu0 0.0
    %343 = vmatpush2.msra.mxu0 0.0
    %344 = vmatprep.subr.mxu0 0.0
    %345 = vmatpush2.msra.mxu0 0.0
    %346 = vmatprep.mubr.f32.mxu0 0.0
    %347 = vmatmul.mubr.f32.gmra.mxu0 %v258
    %v348 = vpop.f32.mrf.mxu0
    %v349 = vadd.f32 %v280, %v348
    %v350 = vpop.f32.mrf.mxu0
    %351 = vdwg.mxu0
    %352 = vst [vmem:[#allocation10] sm:$0xff] %v349
    // Predicated region
    $region46: #{tpu_custom_call.1} parent=1 // pred_check
      _
    $region47: #{tpu_custom_call.1} parent=1 // pred_check_branch
      %354 = sbr.rel (0) target = $region49
    $region48: #{tpu_custom_call.1} parent=1 // pred_region
      %s356 = ssub.s32 128, 128
      %357 = vsyncadd [#allocation4], %s356
      %s359 = sshll.u32 [#allocation10], 4
      %s360 = int_to_ptr.vmem [resolvable:$true] %s359
      %362 = dma.vmem_to_hbm [thread:$0]  %s360, 128, %s7, [#allocation4]
    $region49: #{tpu_custom_call.1} parent=1 // pred_fallthru
      _
    // Predicated region
    $region50: #{tpu_custom_call.1} parent=1 // pred_check
      _
    $region51: #{tpu_custom_call.1} parent=1 // pred_check_branch
      %364 = sbr.rel (0) target = $region53
    $region52: #{tpu_custom_call.1} parent=1 // pred_region
      %365 = dma.done [#allocation4], 128
    $region53: #{tpu_custom_call.1} parent=1 // pred_fallthru
      _
    %366 = vsyncpa [#allocation3], 1
    %367 = vsyncpa [#allocation6], 1
    %368 = vsyncpa [#allocation9], 1
    %369 = vsyncpa [#allocation4], 1

</llo_original>
